<compile_context>
chip_gen: v6e
topology: v6e:2x2x1
jax: 0.10.0
libtpu: 0.0.40
codegen_flags: <defaults>
</compile_context>

<pallas_src>
import jax
import jax.numpy as jnp
from jax import lax
from jax.experimental import pallas as pl
from jax.experimental.pallas import tpu as pltpu

LANES = 128


def _make_kernel(tile_b, feat_dim, chunk_p, n_chunks):
    """Build the kernel for static (tile_b, F, chunk_p, n_chunks)."""

    def kernel(x_ref, convw_ref, fcw_ref, fcb_ref, out_ref):
        # x_ref:     (TILE_B, C, P)   whole spatial extent, spatial on lanes (dense DMA)
        # convw_ref: (F, C)           1x1 conv weight, pre-transposed, resident
        # fcw_ref:   (F, NC_PAD)      fc weight, zero-padded to 128 lanes, pre-scaled by 1/P
        # fcb_ref:   (1, NC_PAD)      fc bias, zero-padded
        # out_ref:   (TILE_B, NC_PAD) logits slab (lane-dense store)
        convw = convw_ref[...]
        fcw = fcw_ref[...]
        fcb = fcb_ref[...]

        pooled_rows = []
        for b in range(tile_b):  # static unroll over the batch tile (weights stay in vregs)
            if n_chunks == 1:
                # Whole spatial extent in one shot.
                feats = jnp.maximum(
                    jnp.dot(convw, x_ref[b], preferred_element_type=jnp.float32), 0.0)
                pooled = jnp.sum(feats, axis=1).reshape(1, feat_dim)
            else:
                # Bound the live (F, chunk) feats intermediate: chunk the spatial axis.
                def chunk_body(k, acc):
                    off = pl.multiple_of(k * chunk_p, chunk_p)
                    xc = x_ref[b, :, pl.ds(off, chunk_p)]            # (C, chunk_p)
                    feats = jnp.maximum(
                        jnp.dot(convw, xc, preferred_element_type=jnp.float32), 0.0)
                    return acc + jnp.sum(feats, axis=1).reshape(1, feat_dim)

                pooled = lax.fori_loop(0, n_chunks, chunk_body,
                                       jnp.zeros((1, feat_dim), jnp.float32),
                                       unroll=n_chunks <= 8)
            pooled_rows.append(pooled)

        pooled_all = (pooled_rows[0] if tile_b == 1
                      else jnp.concatenate(pooled_rows, axis=0))      # (TILE_B, F)

        # Dropout(p=0.4) in eval mode == identity.
        # TODO(synk): training-mode dropout (pltpu.prng_seed + stateful_bernoulli + 1/(1-p))
        # is not wired in.
        logits = jnp.dot(pooled_all, fcw, preferred_element_type=jnp.float32) + fcb
        out_ref[...] = logits.astype(out_ref.dtype)

    return kernel


def _pick_chunk_p(p, cap=2048):
    """Largest spatial chunk <= cap that divides p (falls back to p)."""
    if p <= cap:
        return p
    for c in range(cap, 0, -1):
        if p % c == 0:
            return c
    return p


def _pick_tile_b(batch, c, p, budget_bytes=16 * 1024 * 1024):
    """Largest divisor of batch whose double-buffered f32 x-slab fits the budget."""
    per_row = 2 * c * p * 4
    max_rows = max(1, budget_bytes // max(per_row, 1))
    t = min(batch, max_rows)
    while batch % t != 0:
        t -= 1
    return t


def custom_model_forward(x_nchw, conv_w, fc_w, fc_b, *, tile_b=None, chunk_p=None):
    """x_nchw: (B, C, H, W).  conv_w: (C, F).  fc_w: (F, NC).  fc_b: (NC,).

    Returns logits of shape (B, NC).
    """
    B, C, H, W = x_nchw.shape
    P = H * W
    F = conv_w.shape[1]
    NC = fc_w.shape[1]
    NC_PAD = ((NC + LANES - 1) // LANES) * LANES          # lane-dense output width

    if chunk_p is None:
        chunk_p = _pick_chunk_p(P)
    assert P % chunk_p == 0, "spatial size must be divisible by chunk_p"
    n_chunks = P // chunk_p

    if tile_b is None:
        tile_b = _pick_tile_b(B, C, P)
    assert B % tile_b == 0, "batch must be divisible by tile_b"
    n_btiles = B // tile_b
    # TODO(synk): for B == 1 on v7x, a spatial core-split (two half-P partial sums) would
    # use both TensorCores; not implemented here.

    # NCHW -> (n_btiles, TILE_B, C, P): pure reshape, spatial lands on lanes, and the
    # leading block dims equal the full array dims (no (8,128) constraint issues).
    x = x_nchw.reshape(n_btiles, tile_b, C, P)

    conv_w_t = jnp.transpose(conv_w).astype(jnp.float32)                        # (F, C)
    # Lane-dense fc head: pad classes to 128 and fold the 1/P mean into the weight.
    fc_w_p = (jnp.zeros((F, NC_PAD), jnp.float32).at[:, :NC].set(fc_w.astype(jnp.float32))
              * (1.0 / P))
    fc_b_p = jnp.zeros((1, NC_PAD), jnp.float32).at[0, :NC].set(fc_b.astype(jnp.float32))

    kernel = _make_kernel(tile_b, F, chunk_p, n_chunks)

    flops = 2 * B * P * C * F + 2 * B * F * NC_PAD
    bytes_accessed = (x.size + conv_w_t.size + fc_w_p.size + fc_b_p.size
                      + B * NC_PAD) * 4

    out = pl.pallas_call(
        kernel,
        out_shape=jax.ShapeDtypeStruct((n_btiles, tile_b, NC_PAD), jnp.float32),
        grid=(n_btiles,),
        in_specs=[
            pl.BlockSpec((None, tile_b, C, P), lambda i: (i, 0, 0, 0)),  # whole-P x slab
            pl.BlockSpec((F, C), lambda i: (0, 0)),                      # conv weight (resident)
            pl.BlockSpec((F, NC_PAD), lambda i: (0, 0)),                 # fc weight (scaled, padded)
            pl.BlockSpec((1, NC_PAD), lambda i: (0, 0)),                 # fc bias (padded)
        ],
        out_specs=pl.BlockSpec((None, tile_b, NC_PAD), lambda i: (i, 0, 0)),
        compiler_params=pltpu.CompilerParams(
            dimension_semantics=("parallel",),
            # x double-buffer budget is 16 MiB; 48 MiB scoped VMEM is safe within v7x's
            # 64 MiB physical VMEM and on v5e/v6e.
            vmem_limit_bytes=48 * 1024 * 1024,
        ),
        cost_estimate=pl.CostEstimate(
            flops=flops, transcendentals=0, bytes_accessed=bytes_accessed),
    )(x, conv_w_t, fc_w_p, fc_b_p)

    return out.reshape(B, NC_PAD)[:, :NC]


if __name__ == "__main__":
    # Small shapes consistent with the module's forward:
    #   images (B, C, H, W), in_features=32, num_classes=8
    B, C, H, W = 2, 4, 16, 16
    IN_FEATURES = 32
    NUM_CLASSES = 8

    key = jax.random.PRNGKey(0)
    k_x, k_cw, k_fw, k_fb = jax.random.split(key, 4)

    x = jax.random.normal(k_x, (B, C, H, W), dtype=jnp.float32)
    # Deterministic synthetic parameters (no checkpoint load).
    conv_w = jax.random.normal(k_cw, (C, IN_FEATURES), dtype=jnp.float32) * 0.1
    fc_w = jax.random.normal(k_fw, (IN_FEATURES, NUM_CLASSES), dtype=jnp.float32) * 0.1
    fc_b = jax.random.normal(k_fb, (NUM_CLASSES,), dtype=jnp.float32) * 0.01

    out = custom_model_forward(x, conv_w, fc_w, fc_b)
    out = jax.block_until_ready(out)

    # Pure-JAX f32 reference (same math: 1x1 conv -> ReLU -> global avg pool -> fc).
    xr = x.reshape(B, C, H * W)                                          # (B, C, P)
    feats = jnp.maximum(jnp.einsum('cf,bcp->bfp', conv_w, xr), 0.0)      # (B, F, P)
    pooled = jnp.mean(feats, axis=2)                                     # (B, F)
    ref = pooled @ fc_w + fc_b[None, :]

    assert out.shape == (B, NUM_CLASSES)
    assert jnp.allclose(out, ref, atol=1e-3, rtol=1e-3)

    print("KERNEL_OK")
</pallas_src>

<mosaic_0001>
module attributes {stable_mosaic.version = 11 : i64} {
  func.func @kernel(%arg0: i32, %arg1: memref<1x2x4x256xf32, #tpu.memory_space<vmem>>, %arg2: memref<32x4xf32, #tpu.memory_space<vmem>>, %arg3: memref<32x128xf32, #tpu.memory_space<vmem>>, %arg4: memref<1x128xf32, #tpu.memory_space<vmem>>, %arg5: memref<1x2x128xf32, #tpu.memory_space<vmem>>) attributes {dimension_semantics = [#tpu.dimension_semantics<parallel>], iteration_bounds = array<i64: 1>, scalar_prefetch = 0 : i64, scratch_operands = 0 : i64, tpu.core_type = #tpu.core_type<tc>, window_params = [{transform_indices = @transform_0, window_bounds = array<i64: 1, 2, 4, 256>}, {pipeline_mode = #tpu.pipeline_mode<synchronous>, transform_indices = @transform_1, window_bounds = array<i64: 32, 4>}, {pipeline_mode = #tpu.pipeline_mode<synchronous>, transform_indices = @transform_2, window_bounds = array<i64: 32, 128>}, {pipeline_mode = #tpu.pipeline_mode<synchronous>, transform_indices = @transform_3, window_bounds = array<i64: 1, 128>}, {transform_indices = @transform_4, window_bounds = array<i64: 1, 2, 128>}]} {
    %c0 = arith.constant 0 : index
    %c0_0 = arith.constant 0 : index
    %0 = vector.load %arg2[%c0, %c0_0] : memref<32x4xf32, #tpu.memory_space<vmem>>, vector<32x4xf32>
    %c0_1 = arith.constant 0 : index
    %c0_2 = arith.constant 0 : index
    %1 = vector.load %arg3[%c0_1, %c0_2] : memref<32x128xf32, #tpu.memory_space<vmem>>, vector<32x128xf32>
    %c0_3 = arith.constant 0 : index
    %c0_4 = arith.constant 0 : index
    %2 = vector.load %arg4[%c0_3, %c0_4] : memref<1x128xf32, #tpu.memory_space<vmem>>, vector<1x128xf32>
    %c0_5 = arith.constant 0 : index
    %c0_6 = arith.constant 0 : index
    %c0_7 = arith.constant 0 : index
    %c0_8 = arith.constant 0 : index
    %3 = vector.load %arg1[%c0_5, %c0_6, %c0_7, %c0_8] : memref<1x2x4x256xf32, #tpu.memory_space<vmem>>, vector<1x1x4x256xf32>
    %4 = vector.shape_cast %3 : vector<1x1x4x256xf32> to vector<4x256xf32>
    %cst = arith.constant dense<0.000000e+00> : vector<32x256xf32>
    %5 = tpu.matmul %0, %4, %cst {dimension_numbers = #tpu.dot_dimension_numbers<[1], [0], [0], [1], [0, 0, 1, 1], [], []>} : vector<32x4xf32>, vector<4x256xf32>, vector<32x256xf32> -> vector<32x256xf32>
    %cst_9 = arith.constant 0.000000e+00 : f32
    %6 = vector.broadcast %cst_9 : f32 to vector<32x256xf32>
    %7 = arith.maximumf %5, %6 : vector<32x256xf32>
    %cst_10 = arith.constant dense<0.000000e+00> : vector<32xf32>
    %8 = vector.multi_reduction <add>, %7, %cst_10 [1] : vector<32x256xf32> to vector<32xf32>
    %9 = vector.shape_cast %8 : vector<32xf32> to vector<1x32xf32>
    %c0_11 = arith.constant 0 : index
    %c1 = arith.constant 1 : index
    %c0_12 = arith.constant 0 : index
    %c0_13 = arith.constant 0 : index
    %10 = vector.load %arg1[%c0_11, %c1, %c0_12, %c0_13] : memref<1x2x4x256xf32, #tpu.memory_space<vmem>>, vector<1x1x4x256xf32>
    %11 = vector.shape_cast %10 : vector<1x1x4x256xf32> to vector<4x256xf32>
    %cst_14 = arith.constant dense<0.000000e+00> : vector<32x256xf32>
    %12 = tpu.matmul %0, %11, %cst_14 {dimension_numbers = #tpu.dot_dimension_numbers<[1], [0], [0], [1], [0, 0, 1, 1], [], []>} : vector<32x4xf32>, vector<4x256xf32>, vector<32x256xf32> -> vector<32x256xf32>
    %cst_15 = arith.constant 0.000000e+00 : f32
    %13 = vector.broadcast %cst_15 : f32 to vector<32x256xf32>
    %14 = arith.maximumf %12, %13 : vector<32x256xf32>
    %cst_16 = arith.constant dense<0.000000e+00> : vector<32xf32>
    %15 = vector.multi_reduction <add>, %14, %cst_16 [1] : vector<32x256xf32> to vector<32xf32>
    %16 = vector.shape_cast %15 : vector<32xf32> to vector<1x32xf32>
    %17 = tpu.concatenate %9, %16 in 0 : vector<1x32xf32>, vector<1x32xf32> -> vector<2x32xf32>
    %cst_17 = arith.constant dense<0.000000e+00> : vector<2x128xf32>
    %18 = tpu.matmul %17, %1, %cst_17 {dimension_numbers = #tpu.dot_dimension_numbers<[1], [0], [0], [1], [0, 0, 1, 1], [], []>} : vector<2x32xf32>, vector<32x128xf32>, vector<2x128xf32> -> vector<2x128xf32>
    %19 = vector.broadcast %2 : vector<1x128xf32> to vector<2x128xf32>
    %20 = arith.addf %18, %19 : vector<2x128xf32>
    %c0_18 = arith.constant 0 : index
    %c0_19 = arith.constant 0 : index
    %c0_20 = arith.constant 0 : index
    %21 = vector.load %arg5[%c0_18, %c0_19, %c0_20] : memref<1x2x128xf32, #tpu.memory_space<vmem>>, vector<1x2x128xf32>
    %22 = vector.shape_cast %21 : vector<1x2x128xf32> to vector<2x128xf32>
    %23 = vector.shape_cast %20 : vector<2x128xf32> to vector<1x2x128xf32>
    tpu.vector_store %arg5[%c0_18, %c0_19, %c0_20], %23 {strides = array<i32>} : memref<1x2x128xf32, #tpu.memory_space<vmem>>, vector<1x2x128xf32>,
    return
  }
  func.func @transform_0(%arg0: i32) -> (i32, i32, i32, i32) {
    %c0_i32 = arith.constant 0 : i32
    %c0_i32_0 = arith.constant 0 : i32
    %c0_i32_1 = arith.constant 0 : i32
    %c0_i32_2 = arith.constant 0 : i32
    return %arg0, %c0_i32, %c0_i32_0, %c0_i32_1 : i32, i32, i32, i32
  }
  func.func @transform_1(%arg0: i32) -> (i32, i32) {
    %c0_i32 = arith.constant 0 : i32
    %c0_i32_0 = arith.constant 0 : i32
    %c0_i32_1 = arith.constant 0 : i32
    return %c0_i32, %c0_i32_0 : i32, i32
  }
  func.func @transform_2(%arg0: i32) -> (i32, i32) {
    %c0_i32 = arith.constant 0 : i32
    %c0_i32_0 = arith.constant 0 : i32
    %c0_i32_1 = arith.constant 0 : i32
    return %c0_i32, %c0_i32_0 : i32, i32
  }
  func.func @transform_3(%arg0: i32) -> (i32, i32) {
    %c0_i32 = arith.constant 0 : i32
    %c0_i32_0 = arith.constant 0 : i32
    %c0_i32_1 = arith.constant 0 : i32
    return %c0_i32, %c0_i32_0 : i32, i32
  }
  func.func @transform_4(%arg0: i32) -> (i32, i32, i32) {
    %c0_i32 = arith.constant 0 : i32
    %c0_i32_0 = arith.constant 0 : i32
    %c0_i32_1 = arith.constant 0 : i32
    return %arg0, %c0_i32, %c0_i32_0 : i32, i32, i32
  }
}

</mosaic_0001>

<llo_original>
// kernel: tpu_custom_call.1
$region0: #{tpu_custom_call.1}
  #allocation0 [shape = 'u32[]', space=smem, size = 0x4, offset = 0x4, fixed_abs, tag = 'smem constant byte address 0x4 - core index']
  #allocation1 [shape = 'u32[144,128]{1,0:T(1,128)}', space=vmem, size = 0x12000, scoped, tag = 'internal scratch']
  %s0 = inlined_call_operand.hbm [shape: f32[1,2,4,256], index: 0, kind: input, shape index: {}]
  %s1 = inlined_call_operand.vmem [shape: f32[32,4], index: 1, kind: input, shape index: {}]
  %s2 = inlined_call_operand.vmem [shape: f32[32,128], index: 2, kind: input, shape index: {}]
  %s3 = inlined_call_operand.vmem [shape: f32[1,128], index: 3, kind: input, shape index: {}]
  %s4 = inlined_call_operand.hbm [shape: f32[1,2,128], index: 4, kind: output, shape index: {}]
  %s5 = sld [smem:[#allocation0]]
  $region30: #{tpu_custom_call.1} parent=0
    _
  %s7 = ssub.s32 1, %s5
  %s8 = scalar_select 0, %s7, %s5
  $region1: #{tpu_custom_call.1} parent=0
    #allocation2 [shape = 'u8[8192]{0}', space=vmem, size = 0x2000, scoped, tag = 'input window, operand 0, single buffered']
    #allocation3 [shape = 's32[1]{0}', space=sflag, size = 0x4, scoped, tag = 'scoped memory for tpu_custom_call.1']
    #allocation4 [shape = 's32[1]{0}', space=sflag, size = 0x4, scoped, tag = 'scoped memory for tpu_custom_call.1']
    #allocation5 [shape = 'u8[1024]{0}', space=vmem, size = 0x400, scoped, tag = 'output window, operand 0, single buffered']
    %9 = vsyncpa [#allocation3], 0
    %10 = vsyncpa [#allocation4], 0
    // Predicated region
    $region2: #{tpu_custom_call.1} parent=1 // pred_check
      _
    $region3: #{tpu_custom_call.1} parent=1 // pred_check_branch
      %12 = sbr.rel (0) target = $region5
    $region4: #{tpu_custom_call.1} parent=1 // pred_region
      %s14 = ssub.s32 256, 256
      %15 = vsyncadd [#allocation3], %s14
      %s16 = sshll.u32 [#allocation2], 4
      %s17 = int_to_ptr.vmem [resolvable:$true] %s16
      %22 = dma.hbm_to_vmem [thread:$0]  %s0, 256, %s17, [#allocation3], 128, 128, 8
    $region5: #{tpu_custom_call.1} parent=1 // pred_fallthru
      _
    // Predicated region
    $region6: #{tpu_custom_call.1} parent=1 // pred_check
      _
    $region7: #{tpu_custom_call.1} parent=1 // pred_check_branch
      %24 = sbr.rel (0) target = $region9
    $region8: #{tpu_custom_call.1} parent=1 // pred_region
      _
    $region9: #{tpu_custom_call.1} parent=1 // pred_fallthru
      _
    // Predicated region
    $region10: #{tpu_custom_call.1} parent=1 // pred_check
      _
    $region11: #{tpu_custom_call.1} parent=1 // pred_check_branch
      %26 = sbr.rel (0) target = $region13
    $region12: #{tpu_custom_call.1} parent=1 // pred_region
      _
    $region13: #{tpu_custom_call.1} parent=1 // pred_fallthru
      _
    // Predicated region
    $region14: #{tpu_custom_call.1} parent=1 // pred_check
      _
    $region15: #{tpu_custom_call.1} parent=1 // pred_check_branch
      %28 = sbr.rel (0) target = $region17
    $region16: #{tpu_custom_call.1} parent=1 // pred_region
      _
    $region17: #{tpu_custom_call.1} parent=1 // pred_fallthru
      _
    // Predicated region
    $region18: #{tpu_custom_call.1} parent=1 // pred_check
      _
    $region19: #{tpu_custom_call.1} parent=1 // pred_check_branch
      %30 = sbr.rel (0) target = $region21
    $region20: #{tpu_custom_call.1} parent=1 // pred_region
      %31 = dma.done [#allocation3], 256
    $region21: #{tpu_custom_call.1} parent=1 // pred_fallthru
      _
    %v32 = vld [vmem:[%s1] sm:$0xff]
    %v33 = vld [vmem:[%s1 + $0x8] sm:$0xff]
    %v34 = vld [vmem:[%s1 + $0x10] sm:$0xff]
    %v35 = vld [vmem:[%s1 + $0x18] sm:$0xff]
    %v36 = vld [vmem:[%s2] sm:$0xff]
    %v37 = vld [vmem:[%s2 + $0x8] sm:$0xff]
    %v38 = vld [vmem:[%s2 + $0x10] sm:$0xff]
    %v39 = vld [vmem:[%s2 + $0x18] sm:$0xff]
    %v40 = vld [vmem:[%s3] sm:$0x1]
    %v41 = vld [vmem:[#allocation2] sm:$0xff]
    %v43 = vcombine.high %v41, %v41
    %vm44 = vcmask 31744
    %v46 = vsel %vm44, %v32, 0
    %v49 = vsel %vm44, %v33, 0
    %v52 = vsel %vm44, %v34, 0
    %v55 = vsel %vm44, %v35, 0
    %vm57 = vcmask 1043456
    %v58 = vsel %vm57, %v41, 0
    %v60 = vsel %vm57, %v43, 0
    %62 = vmatprep.subr.mxu0 0.0
    %63 = vmatpush1.msra.mxu0 0.0
    %64 = vmatprep.subr.mxu0 0.0
    %65 = vmatpush1.msra.mxu0 0.0
    %66 = vmatprep.subr.mxu0 0.0
    %67 = vmatpush1.msra.mxu0 0.0
    %68 = vmatprep.subr.mxu0 0.0
    %69 = vmatpush1.msra.mxu0 0.0
    %70 = vmatprep.subr.mxu0 0.0
    %71 = vmatpush1.msra.mxu0 0.0
    %72 = vmatprep.subr.mxu0 0.0
    %73 = vmatpush1.msra.mxu0 0.0
    %74 = vmatprep.subr.mxu0 0.0
    %75 = vmatpush1.msra.mxu0 0.0
    %76 = vmatprep.subr.mxu0 0.0
    %77 = vmatpush1.msra.mxu0 0.0
    %78 = vmatprep.subr.mxu0 0.0
    %79 = vmatpush1.msra.mxu0 0.0
    %80 = vmatprep.subr.mxu0 0.0
    %81 = vmatpush1.msra.mxu0 0.0
    %82 = vmatprep.subr.mxu0 0.0
    %83 = vmatpush1.msra.mxu0 0.0
    %84 = vmatprep.subr.mxu0 0.0
    %85 = vmatpush1.msra.mxu0 0.0
    %86 = vmatprep.subr.mxu0 0.0
    %87 = vmatpush1.msra.mxu0 0.0
    %88 = vmatprep.subr.mxu0 0.0
    %89 = vmatpush1.msra.mxu0 0.0
    %90 = vmatprep.subr.mxu0 0.0
    %91 = vmatpush1.msra.mxu0 0.0
    %92 = vmatprep.subr.mxu0 %v60
    %93 = vmatpush1.msra.mxu0 %v58
    %94 = vmatprep.subr.mxu0 0.0
    %95 = vmatpush2.msra.mxu0 0.0
    %96 = vmatprep.subr.mxu0 0.0
    %97 = vmatpush2.msra.mxu0 0.0
    %98 = vmatprep.subr.mxu0 0.0
    %99 = vmatpush2.msra.mxu0 0.0
    %100 = vmatprep.subr.mxu0 0.0
    %101 = vmatpush2.msra.mxu0 0.0
    %102 = vmatprep.subr.mxu0 0.0
    %103 = vmatpush2.msra.mxu0 0.0
    %104 = vmatprep.subr.mxu0 0.0
    %105 = vmatpush2.msra.mxu0 0.0
    %106 = vmatprep.subr.mxu0 0.0
    %107 = vmatpush2.msra.mxu0 0.0
    %108 = vmatprep.subr.mxu0 0.0
    %109 = vmatpush2.msra.mxu0 0.0
    %110 = vmatprep.subr.mxu0 0.0
    %111 = vmatpush2.msra.mxu0 0.0
    %112 = vmatprep.subr.mxu0 0.0
    %113 = vmatpush2.msra.mxu0 0.0
    %114 = vmatprep.subr.mxu0 0.0
    %115 = vmatpush2.msra.mxu0 0.0
    %116 = vmatprep.subr.mxu0 0.0
    %117 = vmatpush2.msra.mxu0 0.0
    %118 = vmatprep.subr.mxu0 0.0
    %119 = vmatpush2.msra.mxu0 0.0
    %120 = vmatprep.subr.mxu0 0.0
    %121 = vmatpush2.msra.mxu0 0.0
    %122 = vmatprep.subr.mxu0 0.0
    %123 = vmatpush2.msra.mxu0 0.0
    %124 = vmatprep.subr.mxu0 0.0
    %125 = vmatpush2.msra.mxu0 0.0
    %126 = vmatprep.mubr.f32.mxu0 0.0
    %127 = vmatmul.mubr.f32.gmra.mxu0 %v46
    %v128 = vpop.f32.mrf.mxu0
    %v129 = vadd.f32 0.0, %v128
    %v130 = vpop.f32.mrf.mxu0
    %v131 = vadd.f32 0.0, %v130
    %132 = vmatprep.mubr.f32.mxu0 0.0
    %133 = vmatmul.mubr.f32.gmra.mxu0 %v49
    %v134 = vpop.f32.mrf.mxu0
    %v135 = vadd.f32 0.0, %v134
    %v136 = vpop.f32.mrf.mxu0
    %v137 = vadd.f32 0.0, %v136
    %138 = vmatprep.mubr.f32.mxu0 0.0
    %139 = vmatmul.mubr.f32.gmra.mxu0 %v52
    %v140 = vpop.f32.mrf.mxu0
    %v141 = vadd.f32 0.0, %v140
    %v142 = vpop.f32.mrf.mxu0
    %v143 = vadd.f32 0.0, %v142
    %144 = vmatprep.mubr.f32.mxu0 0.0
    %145 = vmatmul.mubr.f32.gmra.mxu0 %v55
    %v146 = vpop.f32.mrf.mxu0
    %v147 = vadd.f32 0.0, %v146
    %v148 = vpop.f32.mrf.mxu0
    %v149 = vadd.f32 0.0, %v148
    %150 = vdwg.mxu0
    %v151 = vmax.f32 %v129, 0.0
    %v152 = vmax.f32 %v131, 0.0
    %v153 = vmax.f32 %v135, 0.0
    %v154 = vmax.f32 %v137, 0.0
    %v155 = vmax.f32 %v141, 0.0
    %v156 = vmax.f32 %v143, 0.0
    %v157 = vmax.f32 %v147, 0.0
    %v158 = vmax.f32 %v149, 0.0
    %v159 = vadd.f32 %v151, %v152
    %160 = vadd.xlane.f32.xlu0 %v159
    %v161 = vpop.xlane.xlu0 %160
    %v162 = vadd.f32 %v153, %v154
    %163 = vadd.xlane.f32.xlu0 %v162
    %v164 = vpop.xlane.xlu0 %163
    %v165 = vadd.f32 %v155, %v156
    %166 = vadd.xlane.f32.xlu0 %v165
    %v167 = vpop.xlane.xlu0 %166
    %v168 = vadd.f32 %v157, %v158
    %169 = vadd.xlane.f32.xlu0 %v168
    %v170 = vpop.xlane.xlu0 %169
    %s171 = scalar_lea.vmem [#allocation2], 8
    %v172 = vld [vmem:[%s171] sm:$0xff]
    %v174 = vcombine.high %v172, %v172
    %v175 = vsel %vm57, %v172, 0
    %v177 = vsel %vm57, %v174, 0
    %179 = vmatprep.subr.mxu0 0.0
    %180 = vmatpush1.msra.mxu0 0.0
    %181 = vmatprep.subr.mxu0 0.0
    %182 = vmatpush1.msra.mxu0 0.0
    %183 = vmatprep.subr.mxu0 0.0
    %184 = vmatpush1.msra.mxu0 0.0
    %185 = vmatprep.subr.mxu0 0.0
    %186 = vmatpush1.msra.mxu0 0.0
    %187 = vmatprep.subr.mxu0 0.0
    %188 = vmatpush1.msra.mxu0 0.0
    %189 = vmatprep.subr.mxu0 0.0
    %190 = vmatpush1.msra.mxu0 0.0
    %191 = vmatprep.subr.mxu0 0.0
    %192 = vmatpush1.msra.mxu0 0.0
    %193 = vmatprep.subr.mxu0 0.0
    %194 = vmatpush1.msra.mxu0 0.0
    %195 = vmatprep.subr.mxu0 0.0
    %196 = vmatpush1.msra.mxu0 0.0
    %197 = vmatprep.subr.mxu0 0.0
    %198 = vmatpush1.msra.mxu0 0.0
    %199 = vmatprep.subr.mxu0 0.0
    %200 = vmatpush1.msra.mxu0 0.0
    %201 = vmatprep.subr.mxu0 0.0
    %202 = vmatpush1.msra.mxu0 0.0
    %203 = vmatprep.subr.mxu0 0.0
    %204 = vmatpush1.msra.mxu0 0.0
    %205 = vmatprep.subr.mxu0 0.0
    %206 = vmatpush1.msra.mxu0 0.0
    %207 = vmatprep.subr.mxu0 0.0
    %208 = vmatpush1.msra.mxu0 0.0
    %209 = vmatprep.subr.mxu0 %v177
    %210 = vmatpush1.msra.mxu0 %v175
    %211 = vmatprep.subr.mxu0 0.0
    %212 = vmatpush2.msra.mxu0 0.0
    %213 = vmatprep.subr.mxu0 0.0
    %214 = vmatpush2.msra.mxu0 0.0
    %215 = vmatprep.subr.mxu0 0.0
    %216 = vmatpush2.msra.mxu0 0.0
    %217 = vmatprep.subr.mxu0 0.0
    %218 = vmatpush2.msra.mxu0 0.0
    %219 = vmatprep.subr.mxu0 0.0
    %220 = vmatpush2.msra.mxu0 0.0
    %221 = vmatprep.subr.mxu0 0.0
    %222 = vmatpush2.msra.mxu0 0.0
    %223 = vmatprep.subr.mxu0 0.0
    %224 = vmatpush2.msra.mxu0 0.0
    %225 = vmatprep.subr.mxu0 0.0
    %226 = vmatpush2.msra.mxu0 0.0
    %227 = vmatprep.subr.mxu0 0.0
    %228 = vmatpush2.msra.mxu0 0.0
    %229 = vmatprep.subr.mxu0 0.0
    %230 = vmatpush2.msra.mxu0 0.0
    %231 = vmatprep.subr.mxu0 0.0
    %232 = vmatpush2.msra.mxu0 0.0
    %233 = vmatprep.subr.mxu0 0.0
    %234 = vmatpush2.msra.mxu0 0.0
    %235 = vmatprep.subr.mxu0 0.0
    %236 = vmatpush2.msra.mxu0 0.0
    %237 = vmatprep.subr.mxu0 0.0
    %238 = vmatpush2.msra.mxu0 0.0
    %239 = vmatprep.subr.mxu0 0.0
    %240 = vmatpush2.msra.mxu0 0.0
    %241 = vmatprep.subr.mxu0 0.0
    %242 = vmatpush2.msra.mxu0 0.0
    %243 = vmatprep.mubr.f32.mxu0 0.0
    %244 = vmatmul.mubr.f32.gmra.mxu0 %v46
    %v245 = vpop.f32.mrf.mxu0
    %v246 = vadd.f32 0.0, %v245
    %v247 = vpop.f32.mrf.mxu0
    %v248 = vadd.f32 0.0, %v247
    %249 = vmatprep.mubr.f32.mxu0 0.0
    %250 = vmatmul.mubr.f32.gmra.mxu0 %v49
    %v251 = vpop.f32.mrf.mxu0
    %v252 = vadd.f32 0.0, %v251
    %v253 = vpop.f32.mrf.mxu0
    %v254 = vadd.f32 0.0, %v253
    %255 = vmatprep.mubr.f32.mxu0 0.0
    %256 = vmatmul.mubr.f32.gmra.mxu0 %v52
    %v257 = vpop.f32.mrf.mxu0
    %v258 = vadd.f32 0.0, %v257
    %v259 = vpop.f32.mrf.mxu0
    %v260 = vadd.f32 0.0, %v259
    %261 = vmatprep.mubr.f32.mxu0 0.0
    %262 = vmatmul.mubr.f32.gmra.mxu0 %v55
    %v263 = vpop.f32.mrf.mxu0
    %v264 = vadd.f32 0.0, %v263
    %v265 = vpop.f32.mrf.mxu0
    %v266 = vadd.f32 0.0, %v265
    %267 = vdwg.mxu0
    %v268 = vmax.f32 %v246, 0.0
    %v269 = vmax.f32 %v248, 0.0
    %v270 = vmax.f32 %v252, 0.0
    %v271 = vmax.f32 %v254, 0.0
    %v272 = vmax.f32 %v258, 0.0
    %v273 = vmax.f32 %v260, 0.0
    %v274 = vmax.f32 %v264, 0.0
    %v275 = vmax.f32 %v266, 0.0
    %v276 = vadd.f32 %v268, %v269
    %277 = vadd.xlane.f32.xlu0 %v276
    %v278 = vpop.xlane.xlu0 %277
    %v279 = vadd.f32 %v270, %v271
    %280 = vadd.xlane.f32.xlu0 %v279
    %v281 = vpop.xlane.xlu0 %280
    %v282 = vadd.f32 %v272, %v273
    %283 = vadd.xlane.f32.xlu0 %v282
    %v284 = vpop.xlane.xlu0 %283
    %v285 = vadd.f32 %v274, %v275
    %286 = vadd.xlane.f32.xlu0 %v285
    %v287 = vpop.xlane.xlu0 %286
    %v292 = vlaneseq
    %v293 = vand.u32 %v292, 127
    %v294 = vlaneseq
    %v295 = vshrl.u32 %v294, 7
    %v296 = vsub.s32 %v293, %v295
    %v297 = vrot.slane %v161, %v296
    %v298 = vadd.s32 %v293, 4294967288
    %v299 = vlaneseq
    %v300 = vshrl.u32 %v299, 7
    %v301 = vsub.s32 %v298, %v300
    %v302 = vrot.slane %v164, %v301
    %vm303 = vcmask 130112
    %v304 = vsel %vm303, %v302, %v297
    %v305 = vadd.s32 %v293, 4294967280
    %v306 = vlaneseq
    %v307 = vshrl.u32 %v306, 7
    %v308 = vsub.s32 %v305, %v307
    %v309 = vrot.slane %v167, %v308
    %vm310 = vcmask 195712
    %v311 = vsel %vm310, %v309, %v304
    %v312 = vadd.s32 %v293, 4294967272
    %v313 = vlaneseq
    %v314 = vshrl.u32 %v313, 7
    %v315 = vsub.s32 %v312, %v314
    %v316 = vrot.slane %v170, %v315
    %vm317 = vcmask 261312
    %v318 = vsel %vm317, %v316, %v311
    %v324 = vlaneseq
    %v325 = vshrl.u32 %v324, 7
    %v326 = vsub.s32 %v293, %v325
    %v327 = vrot.slane %v278, %v326
    %v328 = vlaneseq
    %v329 = vshrl.u32 %v328, 7
    %v330 = vsub.s32 %v298, %v329
    %v331 = vrot.slane %v281, %v330
    %v332 = vsel %vm303, %v331, %v327
    %v333 = vlaneseq
    %v334 = vshrl.u32 %v333, 7
    %v335 = vsub.s32 %v305, %v334
    %v336 = vrot.slane %v284, %v335
    %v337 = vsel %vm310, %v336, %v332
    %v338 = vlaneseq
    %v339 = vshrl.u32 %v338, 7
    %v340 = vsub.s32 %v312, %v339
    %v341 = vrot.slane %v287, %v340
    %v342 = vsel %vm317, %v341, %v337
    %vm344 = vcmask 1040384
    %v345 = vsel %vm344, %v318, %v342
    %v347 = vlaneseq
    %v348 = vshrl.u32 %v347, 7
    %v349 = vsub.s32 0, %v348
    %v350 = vrot.slane %v40, %v349
    %vm352 = vcmask 261120
    %v354 = vsel %vm352, %v345, 0
    %356 = vmatprep.subr.mxu0 0.0
    %357 = vmatpush1.msra.mxu0 0.0
    %358 = vmatprep.subr.mxu0 0.0
    %359 = vmatpush1.msra.mxu0 0.0
    %360 = vmatprep.subr.mxu0 0.0
    %361 = vmatpush1.msra.mxu0 0.0
    %362 = vmatprep.subr.mxu0 0.0
    %363 = vmatpush1.msra.mxu0 0.0
    %364 = vmatprep.subr.mxu0 0.0
    %365 = vmatpush1.msra.mxu0 0.0
    %366 = vmatprep.subr.mxu0 0.0
    %367 = vmatpush1.msra.mxu0 0.0
    %368 = vmatprep.subr.mxu0 0.0
    %369 = vmatpush1.msra.mxu0 0.0
    %370 = vmatprep.subr.mxu0 0.0
    %371 = vmatpush1.msra.mxu0 0.0
    %372 = vmatprep.subr.mxu0 0.0
    %373 = vmatpush1.msra.mxu0 0.0
    %374 = vmatprep.subr.mxu0 0.0
    %375 = vmatpush1.msra.mxu0 0.0
    %376 = vmatprep.subr.mxu0 0.0
    %377 = vmatpush1.msra.mxu0 0.0
    %378 = vmatprep.subr.mxu0 0.0
    %379 = vmatpush1.msra.mxu0 0.0
    %380 = vmatprep.subr.mxu0 0.0
    %381 = vmatpush1.msra.mxu0 %v39
    %382 = vmatprep.subr.mxu0 0.0
    %383 = vmatpush1.msra.mxu0 %v38
    %384 = vmatprep.subr.mxu0 0.0
    %385 = vmatpush1.msra.mxu0 %v37
    %386 = vmatprep.subr.mxu0 0.0
    %387 = vmatpush1.msra.mxu0 %v36
    %388 = vmatprep.subr.mxu0 0.0
    %389 = vmatpush2.msra.mxu0 0.0
    %390 = vmatprep.subr.mxu0 0.0
    %391 = vmatpush2.msra.mxu0 0.0
    %392 = vmatprep.subr.mxu0 0.0
    %393 = vmatpush2.msra.mxu0 0.0
    %394 = vmatprep.subr.mxu0 0.0
    %395 = vmatpush2.msra.mxu0 0.0
    %396 = vmatprep.subr.mxu0 0.0
    %397 = vmatpush2.msra.mxu0 0.0
    %398 = vmatprep.subr.mxu0 0.0
    %399 = vmatpush2.msra.mxu0 0.0
    %400 = vmatprep.subr.mxu0 0.0
    %401 = vmatpush2.msra.mxu0 0.0
    %402 = vmatprep.subr.mxu0 0.0
    %403 = vmatpush2.msra.mxu0 0.0
    %404 = vmatprep.subr.mxu0 0.0
    %405 = vmatpush2.msra.mxu0 0.0
    %406 = vmatprep.subr.mxu0 0.0
    %407 = vmatpush2.msra.mxu0 0.0
    %408 = vmatprep.subr.mxu0 0.0
    %409 = vmatpush2.msra.mxu0 0.0
    %410 = vmatprep.subr.mxu0 0.0
    %411 = vmatpush2.msra.mxu0 0.0
    %412 = vmatprep.subr.mxu0 0.0
    %413 = vmatpush2.msra.mxu0 0.0
    %414 = vmatprep.subr.mxu0 0.0
    %415 = vmatpush2.msra.mxu0 0.0
    %416 = vmatprep.subr.mxu0 0.0
    %417 = vmatpush2.msra.mxu0 0.0
    %418 = vmatprep.subr.mxu0 0.0
    %419 = vmatpush2.msra.mxu0 0.0
    %420 = vmatprep.mubr.f32.mxu0 0.0
    %421 = vmatmul.mubr.f32.gmra.mxu0 %v354
    %v422 = vpop.f32.mrf.mxu0
    %v423 = vadd.f32 %v350, %v422
    %v424 = vpop.f32.mrf.mxu0
    %425 = vdwg.mxu0
    %426 = vst [vmem:[#allocation5] sm:$0x3] %v423
    // Predicated region
    $region22: #{tpu_custom_call.1} parent=1 // pred_check
      _
    $region23: #{tpu_custom_call.1} parent=1 // pred_check_branch
      %428 = sbr.rel (0) target = $region25
    $region24: #{tpu_custom_call.1} parent=1 // pred_region
      %s430 = ssub.s32 32, 32
      %431 = vsyncadd [#allocation4], %s430
      %s433 = sshll.u32 [#allocation5], 4
      %s434 = int_to_ptr.vmem [resolvable:$true] %s433
      %436 = dma.vmem_to_hbm [thread:$0]  %s434, 32, %s4, [#allocation4]
    $region25: #{tpu_custom_call.1} parent=1 // pred_fallthru
      _
    // Predicated region
    $region26: #{tpu_custom_call.1} parent=1 // pred_check
      _
    $region27: #{tpu_custom_call.1} parent=1 // pred_check_branch
      %438 = sbr.rel (0) target = $region29
    $region28: #{tpu_custom_call.1} parent=1 // pred_region
      %439 = dma.done [#allocation4], 32
    $region29: #{tpu_custom_call.1} parent=1 // pred_fallthru
      _
    %440 = vsyncpa [#allocation3], 1
    %441 = vsyncpa [#allocation4], 1

</llo_original>
